<compile_context>
chip_gen: v7x
topology: tpu7x:2x2x1
jax: 0.10.0
libtpu: 0.0.40
codegen_flags: <defaults>
</compile_context>

<pallas_src>
import functools

import jax
import jax.numpy as jnp
from jax.experimental import pallas as pl
from jax.experimental.pallas import tpu as pltpu


def _round_up(v, m):
    return (v + m - 1) // m * m


# ---------------------------------------------------------------------------
# Tiled path: out[i, j] = sum_k x[i, k] * w[j, k] + b[j]
# ---------------------------------------------------------------------------
def _linear_tiled_kernel(x_ref, w_ref, b_ref, o_ref, acc_ref, *, use_bf16_mxu):
    k = pl.program_id(2)

    @pl.when(k == 0)
    def _():
        acc_ref[...] = jnp.zeros_like(acc_ref)

    x = x_ref[...]                          # [tm, tk]
    w = w_ref[...]                          # [tn, tk]  (weight stored [out, in])
    if use_bf16_mxu:                        # bf16-native MXU path (v5e/v6e/v7x)
        x = x.astype(jnp.bfloat16)
        w = w.astype(jnp.bfloat16)
    # Contract x dim 1 with weight dim 1 (== x @ W.T); MXU handles the
    # transposed contraction natively, f32 accumulation.
    acc_ref[...] += jax.lax.dot_general(
        x, w,
        dimension_numbers=(((1,), (1,)), ((), ())),
        preferred_element_type=jnp.float32,
    )

    @pl.when(k == pl.num_programs(2) - 1)
    def _():
        o_ref[...] = (acc_ref[...] + b_ref[...].astype(jnp.float32)).astype(o_ref.dtype)


def _linear_tiled(x, weight, bias, *, tm, tn, tk, use_bf16_mxu):
    B, in_f = x.shape
    out_f = weight.shape[0]

    # Clamp tiles to the (aligned) problem dims: sublane dim multiple of 8,
    # lane dims (N, K) multiples of 128.  Defaults fit comfortably in the
    # 32 MiB scoped VMEM of every generation (v7x: 64 MiB physical).
    tm = min(tm, _round_up(B, 8))
    tn = min(tn, _round_up(out_f, 128))
    tk = min(tk, _round_up(in_f, 128))

    Mp = _round_up(B, tm)
    Np = _round_up(out_f, tn)
    Kp = _round_up(in_f, tk)

    xp = x if (Mp == B and Kp == in_f) else jnp.pad(x, ((0, Mp - B), (0, Kp - in_f)))
    wp = (weight if (Np == out_f and Kp == in_f)
          else jnp.pad(weight, ((0, Np - out_f), (0, Kp - in_f))))
    bp = (bias if Np == out_f else jnp.pad(bias, (0, Np - out_f))).reshape(1, Np)

    grid = (Mp // tm, Np // tn, Kp // tk)

    elt = jnp.dtype(x.dtype).itemsize
    # Double-buffered in/out tiles + f32 accumulator, with 4x headroom,
    # capped at 32 MiB (safe on v5e/v6e/v7x scoped VMEM).
    tile_bytes = 2 * (tm * tk + tn * tk + tm * tn + tn) * elt + tm * tn * 4
    vmem_limit = int(min(32 * 1024 * 1024, max(4 * tile_bytes, 8 * 1024 * 1024)))

    cost = pl.CostEstimate(
        flops=2 * Mp * Np * Kp,
        transcendentals=0,
        bytes_accessed=(Mp * Kp + Np * Kp + Np + Mp * Np) * elt,
    )

    kernel = functools.partial(_linear_tiled_kernel, use_bf16_mxu=use_bf16_mxu)

    out_p = pl.pallas_call(
        kernel,
        out_shape=jax.ShapeDtypeStruct((Mp, Np), x.dtype),
        grid_spec=pltpu.PrefetchScalarGridSpec(
            num_scalar_prefetch=0,
            grid=grid,
            in_specs=[
                pl.BlockSpec((tm, tk), lambda i, j, k: (i, k)),  # x tile
                pl.BlockSpec((tn, tk), lambda i, j, k: (j, k)),  # weight tile [out, in]
                pl.BlockSpec((1, tn), lambda i, j, k: (0, j)),   # bias tile (finalize only)
            ],
            out_specs=pl.BlockSpec((tm, tn), lambda i, j, k: (i, j)),
            scratch_shapes=[pltpu.VMEM((tm, tn), jnp.float32)],
        ),
        compiler_params=pltpu.CompilerParams(
            dimension_semantics=("parallel", "parallel", "arbitrary"),
            vmem_limit_bytes=vmem_limit,
        ),
        cost_estimate=cost,
    )(xp, wp, bp)

    return out_p[:B, :out_f]


# ---------------------------------------------------------------------------
# Tiny-shape fast path: single block, grid=(1,).
# ---------------------------------------------------------------------------
def _linear_small_kernel(x_ref, w_ref, b_ref, o_ref):
    acc = jnp.dot(x_ref[...], w_ref[...], preferred_element_type=jnp.float32)
    o_ref[...] = (acc + b_ref[...]).astype(o_ref.dtype)


def _linear_small(x, weight, bias):
    B, in_f = x.shape
    out_f = weight.shape[0]
    w_t = weight.T                   # negligible at this size (bytes, not MiB)
    b2 = bias.reshape(1, out_f)
    return pl.pallas_call(
        _linear_small_kernel,
        out_shape=jax.ShapeDtypeStruct((B, out_f), x.dtype),
        grid_spec=pltpu.PrefetchScalarGridSpec(
            num_scalar_prefetch=0,
            grid=(1,),
            in_specs=[
                pl.BlockSpec((B, in_f), lambda i: (0, 0)),
                pl.BlockSpec((in_f, out_f), lambda i: (0, 0)),
                pl.BlockSpec((1, out_f), lambda i: (0, 0)),
            ],
            out_specs=pl.BlockSpec((B, out_f), lambda i: (0, 0)),
        ),
        compiler_params=pltpu.CompilerParams(dimension_semantics=("arbitrary",)),
    )(x, w_t, b2)


def linear_forward(x, weight, bias, *, tm=256, tn=256, tk=512, use_bf16_mxu=False):
    """PyTorch nn.Linear semantics: y = x @ weight.T + bias.

    x: [B, in_features]; weight: [out_features, in_features]; bias: [out_features].
    """
    B, in_f = x.shape
    out_f = weight.shape[0]
    # Tiny problems: one block; per-grid-step overhead (~0.35 us) would dominate.
    # TODO(synk): at nn.Linear(2, 1) scale a fused XLA `x @ W.T + b` outside
    # Pallas is strictly faster than any Pallas call; the Pallas path is kept
    # for parity with the module spec.
    if B * in_f * out_f <= 4096:
        return _linear_small(x, weight, bias)
    return _linear_tiled(x, weight, bias, tm=tm, tn=tn, tk=tk,
                         use_bf16_mxu=use_bf16_mxu)


if __name__ == "__main__":
    key = jax.random.PRNGKey(0)
    kx, kw, kb, kx2, kw2, kb2 = jax.random.split(key, 6)

    # ---- Shapes implied by LinearModel: nn.Linear(2, 1) on a small batch. ----
    batch, in_features, out_features = 8, 2, 1
    x = jax.random.normal(kx, (batch, in_features), dtype=jnp.float32)
    weight = jax.random.normal(kw, (out_features, in_features), dtype=jnp.float32) * 0.5
    bias = jax.random.normal(kb, (out_features,), dtype=jnp.float32) * 0.1

    out = linear_forward(x, weight, bias)
    jax.block_until_ready(out)
    ref = x @ weight.T + bias
    assert out.shape == (batch, out_features)
    assert jnp.allclose(out, ref, atol=1e-5, rtol=1e-5)

    # ---- Also exercise the tiled MXU path (non-tile-multiple dims -> padding,
    #      K grid of 2 -> accumulator init/finalize path). ----
    B2, IN2, OUT2 = 200, 1000, 300
    x2 = jax.random.normal(kx2, (B2, IN2), dtype=jnp.float32)
    w2 = jax.random.normal(kw2, (OUT2, IN2), dtype=jnp.float32) * 0.05
    b2 = jax.random.normal(kb2, (OUT2,), dtype=jnp.float32) * 0.1

    out2 = linear_forward(x2, w2, b2)
    jax.block_until_ready(out2)
    ref2 = jnp.dot(x2, w2.T, precision=jax.lax.Precision.HIGHEST) + b2
    assert out2.shape == (B2, OUT2)
    assert jnp.allclose(out2, ref2, atol=1e-2, rtol=1e-2)

    print("KERNEL_OK")
</pallas_src>

<mosaic_0001>
module attributes {stable_mosaic.version = 11 : i64} {
  func.func @_linear_small_kernel(%arg0: i32, %arg1: memref<8x2xf32, #tpu.memory_space<vmem>>, %arg2: memref<2x1xf32, #tpu.memory_space<vmem>>, %arg3: memref<1x1xf32, #tpu.memory_space<vmem>>, %arg4: memref<8x1xf32, #tpu.memory_space<vmem>>) attributes {dimension_semantics = [#tpu.dimension_semantics<arbitrary>], iteration_bounds = array<i64: 1>, scalar_prefetch = 0 : i64, scratch_operands = 0 : i64, tpu.core_type = #tpu.core_type<tc>, window_params = [{pipeline_mode = #tpu.pipeline_mode<synchronous>, transform_indices = @transform_0, window_bounds = array<i64: 8, 2>}, {pipeline_mode = #tpu.pipeline_mode<synchronous>, transform_indices = @transform_1, window_bounds = array<i64: 2, 1>}, {pipeline_mode = #tpu.pipeline_mode<synchronous>, transform_indices = @transform_2, window_bounds = array<i64: 1, 1>}, {pipeline_mode = #tpu.pipeline_mode<synchronous>, transform_indices = @transform_3, window_bounds = array<i64: 8, 1>}]} {
    %c0 = arith.constant 0 : index
    %c0_0 = arith.constant 0 : index
    %0 = vector.load %arg1[%c0, %c0_0] : memref<8x2xf32, #tpu.memory_space<vmem>>, vector<8x2xf32>
    %c0_1 = arith.constant 0 : index
    %c0_2 = arith.constant 0 : index
    %1 = vector.load %arg2[%c0_1, %c0_2] : memref<2x1xf32, #tpu.memory_space<vmem>>, vector<2x1xf32>
    %cst = arith.constant dense<0.000000e+00> : vector<8x1xf32>
    %2 = tpu.matmul %0, %1, %cst {dimension_numbers = #tpu.dot_dimension_numbers<[1], [0], [0], [1], [0, 0, 1, 1], [], []>} : vector<8x2xf32>, vector<2x1xf32>, vector<8x1xf32> -> vector<8x1xf32>
    %c0_3 = arith.constant 0 : index
    %c0_4 = arith.constant 0 : index
    %3 = vector.load %arg3[%c0_3, %c0_4] : memref<1x1xf32, #tpu.memory_space<vmem>>, vector<1x1xf32>
    %4 = vector.broadcast %3 : vector<1x1xf32> to vector<8x1xf32>
    %5 = arith.addf %2, %4 : vector<8x1xf32>
    %c0_5 = arith.constant 0 : index
    %c0_6 = arith.constant 0 : index
    %6 = vector.load %arg4[%c0_5, %c0_6] : memref<8x1xf32, #tpu.memory_space<vmem>>, vector<8x1xf32>
    tpu.vector_store %arg4[%c0_5, %c0_6], %5 {strides = array<i32>} : memref<8x1xf32, #tpu.memory_space<vmem>>, vector<8x1xf32>,
    return
  }
  func.func @transform_0(%arg0: i32) -> (i32, i32) {
    %c0_i32 = arith.constant 0 : i32
    %c0_i32_0 = arith.constant 0 : i32
    %c0_i32_1 = arith.constant 0 : i32
    return %c0_i32, %c0_i32_0 : i32, i32
  }
  func.func @transform_1(%arg0: i32) -> (i32, i32) {
    %c0_i32 = arith.constant 0 : i32
    %c0_i32_0 = arith.constant 0 : i32
    %c0_i32_1 = arith.constant 0 : i32
    return %c0_i32, %c0_i32_0 : i32, i32
  }
  func.func @transform_2(%arg0: i32) -> (i32, i32) {
    %c0_i32 = arith.constant 0 : i32
    %c0_i32_0 = arith.constant 0 : i32
    %c0_i32_1 = arith.constant 0 : i32
    return %c0_i32, %c0_i32_0 : i32, i32
  }
  func.func @transform_3(%arg0: i32) -> (i32, i32) {
    %c0_i32 = arith.constant 0 : i32
    %c0_i32_0 = arith.constant 0 : i32
    %c0_i32_1 = arith.constant 0 : i32
    return %c0_i32, %c0_i32_0 : i32, i32
  }
}

</mosaic_0001>

<llo_original>
// kernel: tpu_custom_call.1
$region0: #{tpu_custom_call.1}
  #allocation0 [shape = 'u32[]', space=smem, size = 0x4, offset = 0x4, fixed_abs, tag = 'smem constant byte address 0x4 - core index']
  #allocation1 [shape = 'u32[144,128]{1,0:T(1,128)}', space=vmem, size = 0x12000, scoped, tag = 'internal scratch']
  #allocation2 [shape = 'f32[1,1]{1,0:T(1,128)S(1)}', space=vmem, size = 0x200, scoped, tag = 'scoped memory for tpu_custom_call.1']
  %s0 = inlined_call_operand.vmem [shape: f32[8,2], index: 0, kind: input, shape index: {}]
  %s1 = inlined_call_operand.vmem [shape: f32[2,1], index: 1, kind: input, shape index: {}]
  %s2 = inlined_call_operand.<no memory space> [shape: f32[1,1], index: 2, kind: input, shape index: {}]
  %s3 = inlined_call_operand.vmem [shape: f32[8,1], index: 3, kind: output, shape index: {}]
  %s4 = sld [smem:[#allocation0]]
  $region22: #{tpu_custom_call.1} parent=0
    _
  %s6 = ssub.s32 1, %s4
  %s7 = scalar_select 0, %s6, %s4
  %v8 = vstv %s2
  %9 = vst [vmem:[#allocation2] sm:$0x1] %v8
  // Predicated region
  $region2: #{tpu_custom_call.1} parent=0 // pred_check
    _
  $region3: #{tpu_custom_call.1} parent=0 // pred_check_branch
    %11 = sbr.rel (0) target = $region5
  $region4: #{tpu_custom_call.1} parent=0 // pred_region
    _
  $region5: #{tpu_custom_call.1} parent=0 // pred_fallthru
    _
  // Predicated region
  $region6: #{tpu_custom_call.1} parent=0 // pred_check
    _
  $region7: #{tpu_custom_call.1} parent=0 // pred_check_branch
    %13 = sbr.rel (0) target = $region9
  $region8: #{tpu_custom_call.1} parent=0 // pred_region
    _
  $region9: #{tpu_custom_call.1} parent=0 // pred_fallthru
    _
  // Predicated region
  $region10: #{tpu_custom_call.1} parent=0 // pred_check
    _
  $region11: #{tpu_custom_call.1} parent=0 // pred_check_branch
    %15 = sbr.rel (0) target = $region13
  $region12: #{tpu_custom_call.1} parent=0 // pred_region
    _
  $region13: #{tpu_custom_call.1} parent=0 // pred_fallthru
    _
  %v16 = vld [vmem:[%s0] sm:$0xff]
  %v17 = vld [vmem:[%s1] sm:$0x3]
  %v18 = vld [vmem:[#allocation2] sm:$0x1]
  %v20 = vlaneseq
  %v21 = vshrl.u32 %v20, 7
  %v22 = vsub.s32 0, %v21
  %v23 = vrot.slane %v18, %v22
  %vm25 = vcmask 15360
  %v27 = vsel %vm25, %v16, 0
  %vm29 = vcmask 1041408
  %v31 = vsel %vm29, %v17, 0
  %33 = vmatprep.subr.mxu0 0.0
  %34 = vmatpush1.msra.mxu0 %v31
  %35 = vmatprep.subr.mxu0 0.0
  %36 = vmatpush1.msra.mxu0 0.0
  %37 = vmatprep.subr.mxu0 0.0
  %38 = vmatpush1.msra.mxu0 0.0
  %39 = vmatprep.subr.mxu0 0.0
  %40 = vmatpush1.msra.mxu0 0.0
  %41 = vmatprep.subr.mxu0 0.0
  %42 = vmatpush1.msra.mxu0 0.0
  %43 = vmatprep.subr.mxu0 0.0
  %44 = vmatpush1.msra.mxu0 0.0
  %45 = vmatprep.subr.mxu0 0.0
  %46 = vmatpush1.msra.mxu0 0.0
  %47 = vmatprep.subr.mxu0 0.0
  %48 = vmatpush1.msra.mxu0 0.0
  %49 = vmatprep.subr.mxu0 0.0
  %50 = vmatpush1.msra.mxu0 0.0
  %51 = vmatprep.subr.mxu0 0.0
  %52 = vmatpush1.msra.mxu0 0.0
  %53 = vmatprep.subr.mxu0 0.0
  %54 = vmatpush1.msra.mxu0 0.0
  %55 = vmatprep.subr.mxu0 0.0
  %56 = vmatpush1.msra.mxu0 0.0
  %57 = vmatprep.subr.mxu0 0.0
  %58 = vmatpush1.msra.mxu0 0.0
  %59 = vmatprep.subr.mxu0 0.0
  %60 = vmatpush1.msra.mxu0 0.0
  %61 = vmatprep.subr.mxu0 0.0
  %62 = vmatpush1.msra.mxu0 0.0
  %63 = vmatprep.subr.mxu0 0.0
  %64 = vmatpush1.msra.mxu0 0.0
  %65 = vmatprep.subr.mxu0 0.0
  %66 = vmatpush1.msra.mxu0 0.0
  %67 = vmatprep.subr.mxu0 0.0
  %68 = vmatpush1.msra.mxu0 0.0
  %69 = vmatprep.subr.mxu0 0.0
  %70 = vmatpush1.msra.mxu0 0.0
  %71 = vmatprep.subr.mxu0 0.0
  %72 = vmatpush1.msra.mxu0 0.0
  %73 = vmatprep.subr.mxu0 0.0
  %74 = vmatpush1.msra.mxu0 0.0
  %75 = vmatprep.subr.mxu0 0.0
  %76 = vmatpush1.msra.mxu0 0.0
  %77 = vmatprep.subr.mxu0 0.0
  %78 = vmatpush1.msra.mxu0 0.0
  %79 = vmatprep.subr.mxu0 0.0
  %80 = vmatpush1.msra.mxu0 0.0
  %81 = vmatprep.subr.mxu0 0.0
  %82 = vmatpush1.msra.mxu0 0.0
  %83 = vmatprep.subr.mxu0 0.0
  %84 = vmatpush1.msra.mxu0 0.0
  %85 = vmatprep.subr.mxu0 0.0
  %86 = vmatpush1.msra.mxu0 0.0
  %87 = vmatprep.subr.mxu0 0.0
  %88 = vmatpush1.msra.mxu0 0.0
  %89 = vmatprep.subr.mxu0 0.0
  %90 = vmatpush1.msra.mxu0 0.0
  %91 = vmatprep.subr.mxu0 0.0
  %92 = vmatpush1.msra.mxu0 0.0
  %93 = vmatprep.subr.mxu0 0.0
  %94 = vmatpush1.msra.mxu0 0.0
  %95 = vmatprep.subr.mxu0 0.0
  %96 = vmatpush1.msra.mxu0 0.0
  %97 = vmatprep.mubr.f32.mxu0 0.0
  %98 = vmatmul.mubr.f32.gmra.mrb[0].mxu0 %v27
  %v99 = vpop.f32.mrb[0].mxu0
  %v100 = vadd.f32 %v23, %v99
  %v101 = vpop.f32.mrb[0].mxu0
  %102 = vdwg.mxu0
  %vm103 = vcmask 7168
  %104 = vst.msk [vmem:[%s3] sm:$0xff] %vm103, %v100
  // Predicated region
  $region14: #{tpu_custom_call.1} parent=0 // pred_check
    _
  $region15: #{tpu_custom_call.1} parent=0 // pred_check_branch
    %106 = sbr.rel (0) target = $region17
  $region16: #{tpu_custom_call.1} parent=0 // pred_region
    _
  $region17: #{tpu_custom_call.1} parent=0 // pred_fallthru
    _
  // Predicated region
  $region18: #{tpu_custom_call.1} parent=0 // pred_check
    _
  $region19: #{tpu_custom_call.1} parent=0 // pred_check_branch
    %108 = sbr.rel (0) target = $region21
  $region20: #{tpu_custom_call.1} parent=0 // pred_region
    _
  $region21: #{tpu_custom_call.1} parent=0 // pred_fallthru
    _

</llo_original>
